<compile_context>
chip_gen: v7x
topology: tpu7x:2x2x1
jax: 0.10.0
libtpu: 0.0.40
codegen_flags: <defaults>
</compile_context>

<pallas_src>
import math

import jax
import jax.numpy as jnp
from jax.experimental import pallas as pl
from jax.experimental.pallas import tpu as pltpu

# torch.nn.RMSNorm(eps=None) uses torch.finfo(x.dtype).eps
_F32_EPS = float(jnp.finfo(jnp.float32).eps)
_PI = math.pi
_INV_2PI = 1.0 / (2.0 * math.pi)


def _cdiv(a, b):
    return -(-a // b)


def _pdu_read_kernel(q_ref, phi_ref, s_ref, m_ref, g_ref, w_ref, b_ref, o_ref):
    # Inputs arrive in their storage dtype; do all elementwise math in f32.
    q = q_ref[...].astype(jnp.float32)
    phi = phi_ref[...].astype(jnp.float32)
    s = s_ref[...].astype(jnp.float32)
    m = m_ref[...].astype(jnp.float32)

    # z = m * exp(i*phi), m real:  |z| = |m|,  angle(z) = wrap(phi + pi*[m<0]).
    # NOTE: this wrap maps +pi -> -pi (range [-pi, pi) vs atan2's (-pi, pi]).
    # That is benign ONLY because solely cos(s*theta) is consumed and cos is
    # even -- do not add a sin() term later without revisiting this.
    r = jnp.abs(m)
    theta_raw = phi + jnp.where(m < 0.0, _PI, 0.0)
    theta = theta_raw - (2.0 * _PI) * jnp.floor((theta_raw + _PI) * _INV_2PI)

    # z ** s = |z|**s * exp(i * s * angle(z)); query is real, keep real part.
    # r == 0 is guarded to 0 (torch's exp(s*log z) would NaN at 0); assumes
    # sharpening > 0 (documented limitation for memory==0, s<=0).
    safe_r = jnp.where(r > 0.0, r, 1.0)
    mag = jnp.where(r > 0.0, jnp.exp(s * jnp.log(safe_r)), 0.0)
    # TODO(synk): on v7x (higher HBM roofline) the log/exp/cos chain may
    # saturate the single EUP slot; add an s==1 fast path (mag = r) or a bf16
    # transcendental path if profiling shows EUP-bound.
    read = q * mag * jnp.cos(s * theta)

    # RMSNorm over d_memory (last axis). Per-row reduction only: garbage rows
    # in a ragged tail block cannot contaminate valid rows.
    ms = jnp.mean(read * read, axis=-1, keepdims=True)
    read = read * jax.lax.rsqrt(ms + _F32_EPS) * g_ref[...]

    # Linear(d_memory -> d_out) on the MXU; operand dtype follows the weight
    # (bf16 weights -> native bf16 MXU path), accumulate in f32.
    o_ref[...] = (jnp.dot(read.astype(w_ref.dtype), w_ref[...],
                          preferred_element_type=jnp.float32)
                  + b_ref[...]).astype(o_ref.dtype)


def _vmem_plan():
    """Generation-aware (streaming_budget_bytes, scoped_vmem_limit_bytes)."""
    vmem_cap = None
    try:
        info = pltpu.get_tpu_info()
        for name in ("vmem_capacity_bytes", "vmem_size_bytes", "vmem_bytes"):
            val = getattr(info, name, None)
            if val:
                vmem_cap = int(val)
                break
    except Exception:
        vmem_cap = None
    if vmem_cap is not None and vmem_cap >= (96 << 20):
        # v5e / v6e class: 128 MiB VMEM per TensorCore -> big tiles, few steps.
        return 28 << 20, 64 << 20
    # v7x (64 MiB physical VMEM) or unknown: conservative, keep headroom for
    # compiler scratch + double-buffering.
    return 16 << 20, 48 << 20


def pdu_memory_read(query, phase, sharp, memory, gamma, weight, bias, *,
                    tm=None, matmul_dtype=None):
    """query/phase/sharp/memory: (..., d_memory); returns (..., d_model)."""
    lead = query.shape[:-1]
    d_mem = query.shape[-1]
    d_model = weight.shape[1]
    n = max(1, math.prod(lead))

    # Lane-dense output padding only when the rounding waste is small (<=25%).
    # For small d_model (e.g. 16) padded stores + a host column-slice cost
    # more HBM bytes than the masked vst they avoid.
    d_out = _cdiv(d_model, 128) * 128
    if d_out != d_model and d_out * 4 > d_model * 5:
        d_out = d_model
    if d_out != d_model:
        # NOTE: in production hoist/cache this pad at module init (under jit
        # it re-runs every call).
        weight = jnp.pad(weight, ((0, 0), (0, d_out - d_model)))
        bias = jnp.pad(bias, ((0, d_out - d_model),))

    if matmul_dtype is not None:
        # Optional: pre-cast projection weight (e.g. bf16) for the native MXU
        # path + half the resident VMEM; do it once at init in production.
        weight = weight.astype(matmul_dtype)

    # Flatten leading dims to a row axis; keep native storage dtype (no
    # wrapper upcast -> no extra HBM round trip). In-kernel f32 cast rides
    # VPU slack.
    # TODO(synk): when d_memory < 128 the elementwise/transcendental stage
    # fills only d_memory of 128 lanes; if the kernel ever becomes compute-
    # bound (v7x), fold 128//d_memory rows into the lane axis for that stage.
    q2, p2, s2, m2 = (a.reshape(n, d_mem) for a in (query, phase, sharp, memory))
    out_itemsize = jnp.dtype(query.dtype).itemsize

    g2 = gamma.reshape(1, d_mem).astype(jnp.float32)   # RMSNorm weight
    w2 = weight                                        # (d_mem, d_out) == torch W.T (padded)
    b2 = bias.reshape(1, d_out).astype(jnp.float32)

    budget, vmem_limit = _vmem_plan()

    # Row tile: sized by streaming bytes per grid step (double-buffered input
    # + output tiles, plus an estimate of in-kernel f32 intermediates), within
    # the generation-aware budget after subtracting resident parameter blocks.
    if tm is None:
        in_bytes_row = sum(jnp.dtype(a.dtype).itemsize for a in (q2, p2, s2, m2)) * d_mem
        out_bytes_row = d_out * out_itemsize
        f32_tmp_row = 8 * 4 * d_mem                      # kernel f32 temporaries
        per_row = 2 * (in_bytes_row + out_bytes_row) + f32_tmp_row
        param_bytes = 2 * (int(w2.size) * jnp.dtype(w2.dtype).itemsize
                           + (d_mem + d_out) * 4)
        avail = max(budget - param_bytes, 1 << 20)
        tm = max(8, (avail // per_row) // 8 * 8)

    tm = min(tm, _cdiv(n, 8) * 8)                        # never tile past the rows
    if n > 8:
        # Keep >= 2 grid steps so the "parallel" axis can shard across both
        # TensorCores on dual-core chips (v7x); near-free on single-TC chips.
        tm = max(8, min(tm, _cdiv(_cdiv(n, 2), 8) * 8))

    grid = (_cdiv(n, tm),)
    row_spec = pl.BlockSpec((tm, d_mem), lambda i: (i, 0))

    # Constant-index parameter blocks: single-buffer when large enough to
    # matter for VMEM (double-buffering a big weight wastes half its bytes,
    # most painful on v7x's 64 MiB VMEM). Tiny params keep the default.
    def _const_spec(shape, nbytes):
        if nbytes >= (1 << 20) and hasattr(pl, "Buffered"):
            return pl.BlockSpec(shape, lambda i: (0,) * len(shape),
                                pipeline_mode=pl.Buffered(1))
        return pl.BlockSpec(shape, lambda i: (0,) * len(shape))

    out = pl.pallas_call(
        _pdu_read_kernel,
        out_shape=jax.ShapeDtypeStruct((n, d_out), query.dtype),
        grid=grid,
        in_specs=[row_spec, row_spec, row_spec, row_spec,
                  _const_spec((1, d_mem), int(g2.size) * 4),
                  _const_spec((d_mem, d_out),
                              int(w2.size) * jnp.dtype(w2.dtype).itemsize),
                  _const_spec((1, d_out), int(b2.size) * 4)],
        out_specs=pl.BlockSpec((tm, d_out), lambda i: (i, 0)),
        compiler_params=pltpu.CompilerParams(
            dimension_semantics=("parallel",),
            vmem_limit_bytes=vmem_limit),
    )(q2, p2, s2, m2, g2, w2, b2)

    if d_out != d_model:
        out = out[:, :d_model]
    return out.reshape(*lead, d_model)


def _reference(query, phase, sharp, memory, gamma, weight, bias):
    """Pure-JAX reference with the same torch semantics (uses atan2)."""
    re = memory * jnp.cos(phase)
    im = memory * jnp.sin(phase)
    r = jnp.sqrt(re * re + im * im)
    theta = jnp.arctan2(im, re)
    mag = jnp.where(r > 0, jnp.exp(sharp * jnp.log(jnp.where(r > 0, r, 1.0))), 0.0)
    read = query * mag * jnp.cos(sharp * theta)
    ms = jnp.mean(read * read, axis=-1, keepdims=True)
    read = read * jax.lax.rsqrt(ms + _F32_EPS) * gamma
    return read @ weight + bias


if __name__ == "__main__":
    key = jax.random.PRNGKey(0)
    kq, kp, ks, km, kw, kb = jax.random.split(key, 6)

    batch, chunk, timestep = 2, 2, 8
    d_memory, d_model = 32, 16
    shape = (batch, chunk, timestep, d_memory)

    # ReadControls tensors + memory (real-valued; complex math done in-kernel)
    query = jax.random.normal(kq, shape, dtype=jnp.float32)
    phase = jax.random.uniform(kp, shape, dtype=jnp.float32, minval=-4.0, maxval=4.0)
    sharp = jax.random.uniform(ks, shape, dtype=jnp.float32, minval=0.5, maxval=1.5)
    memory = jax.random.normal(km, shape, dtype=jnp.float32)

    # Deterministic synthetic parameters (shapes from the nn.Module __init__)
    gamma = jnp.ones((d_memory,), dtype=jnp.float32)                        # RMSNorm weight
    weight = 0.1 * jax.random.normal(kw, (d_memory, d_model), jnp.float32)  # Linear weight (transposed)
    bias = 0.1 * jax.random.normal(kb, (d_model,), jnp.float32)             # Linear bias

    out = pdu_memory_read(query, phase, sharp, memory, gamma, weight, bias)
    jax.block_until_ready(out)

    ref = _reference(query, phase, sharp, memory, gamma, weight, bias)
    assert out.shape == (batch, chunk, timestep, d_model)
    assert jnp.allclose(out, ref, rtol=2e-4, atol=2e-4), float(jnp.max(jnp.abs(out - ref)))
    print("KERNEL_OK")
</pallas_src>

<mosaic_0001>
module attributes {stable_mosaic.version = 11 : i64} {
  func.func @_pdu_read_kernel(%arg0: i32, %arg1: memref<16x32xf32, #tpu.memory_space<vmem>>, %arg2: memref<16x32xf32, #tpu.memory_space<vmem>>, %arg3: memref<16x32xf32, #tpu.memory_space<vmem>>, %arg4: memref<16x32xf32, #tpu.memory_space<vmem>>, %arg5: memref<1x32xf32, #tpu.memory_space<vmem>>, %arg6: memref<32x16xf32, #tpu.memory_space<vmem>>, %arg7: memref<1x16xf32, #tpu.memory_space<vmem>>, %arg8: memref<16x16xf32, #tpu.memory_space<vmem>>) attributes {dimension_semantics = [#tpu.dimension_semantics<parallel>], iteration_bounds = array<i64: 2>, scalar_prefetch = 0 : i64, scratch_operands = 0 : i64, tpu.core_type = #tpu.core_type<tc>, window_params = [{transform_indices = @transform_0, window_bounds = array<i64: 16, 32>}, {transform_indices = @transform_1, window_bounds = array<i64: 16, 32>}, {transform_indices = @transform_2, window_bounds = array<i64: 16, 32>}, {transform_indices = @transform_3, window_bounds = array<i64: 16, 32>}, {pipeline_mode = #tpu.pipeline_mode<synchronous>, transform_indices = @transform_4, window_bounds = array<i64: 1, 32>}, {pipeline_mode = #tpu.pipeline_mode<synchronous>, transform_indices = @transform_5, window_bounds = array<i64: 32, 16>}, {pipeline_mode = #tpu.pipeline_mode<synchronous>, transform_indices = @transform_6, window_bounds = array<i64: 1, 16>}, {transform_indices = @transform_7, window_bounds = array<i64: 16, 16>}]} {
    %c0 = arith.constant 0 : index
    %c0_0 = arith.constant 0 : index
    %0 = vector.load %arg1[%c0, %c0_0] : memref<16x32xf32, #tpu.memory_space<vmem>>, vector<16x32xf32>
    %c0_1 = arith.constant 0 : index
    %c0_2 = arith.constant 0 : index
    %1 = vector.load %arg2[%c0_1, %c0_2] : memref<16x32xf32, #tpu.memory_space<vmem>>, vector<16x32xf32>
    %c0_3 = arith.constant 0 : index
    %c0_4 = arith.constant 0 : index
    %2 = vector.load %arg3[%c0_3, %c0_4] : memref<16x32xf32, #tpu.memory_space<vmem>>, vector<16x32xf32>
    %c0_5 = arith.constant 0 : index
    %c0_6 = arith.constant 0 : index
    %3 = vector.load %arg4[%c0_5, %c0_6] : memref<16x32xf32, #tpu.memory_space<vmem>>, vector<16x32xf32>
    %4 = math.absf %3 : vector<16x32xf32>
    %cst = arith.constant 0.000000e+00 : f32
    %5 = vector.broadcast %cst : f32 to vector<16x32xf32>
    %6 = arith.cmpf olt, %3, %5 : vector<16x32xf32>
    %cst_7 = arith.constant 3.14159274 : f32
    %cst_8 = arith.constant 0.000000e+00 : f32
    %7 = vector.broadcast %cst_7 : f32 to vector<16x32xf32>
    %8 = vector.broadcast %cst_8 : f32 to vector<16x32xf32>
    %9 = arith.select %6, %7, %8 : vector<16x32xi1>, vector<16x32xf32>
    %10 = arith.addf %1, %9 : vector<16x32xf32>
    %cst_9 = arith.constant 3.14159274 : f32
    %11 = vector.broadcast %cst_9 : f32 to vector<16x32xf32>
    %12 = arith.addf %10, %11 : vector<16x32xf32>
    %cst_10 = arith.constant 0.159154937 : f32
    %13 = vector.broadcast %cst_10 : f32 to vector<16x32xf32>
    %14 = arith.mulf %12, %13 : vector<16x32xf32>
    %15 = math.floor %14 : vector<16x32xf32>
    %cst_11 = arith.constant 6.28318548 : f32
    %16 = vector.broadcast %cst_11 : f32 to vector<16x32xf32>
    %17 = arith.mulf %16, %15 : vector<16x32xf32>
    %18 = arith.subf %10, %17 : vector<16x32xf32>
    %cst_12 = arith.constant 0.000000e+00 : f32
    %19 = vector.broadcast %cst_12 : f32 to vector<16x32xf32>
    %20 = arith.cmpf ogt, %4, %19 : vector<16x32xf32>
    %cst_13 = arith.constant 1.000000e+00 : f32
    %21 = vector.broadcast %cst_13 : f32 to vector<16x32xf32>
    %22 = arith.select %20, %4, %21 : vector<16x32xi1>, vector<16x32xf32>
    %cst_14 = arith.constant 0.000000e+00 : f32
    %23 = vector.broadcast %cst_14 : f32 to vector<16x32xf32>
    %24 = arith.cmpf ogt, %4, %23 : vector<16x32xf32>
    %25 = math.log %22 : vector<16x32xf32>
    %26 = arith.mulf %2, %25 : vector<16x32xf32>
    %27 = math.exp %26 : vector<16x32xf32>
    %cst_15 = arith.constant 0.000000e+00 : f32
    %28 = vector.broadcast %cst_15 : f32 to vector<16x32xf32>
    %29 = arith.select %24, %27, %28 : vector<16x32xi1>, vector<16x32xf32>
    %30 = arith.mulf %0, %29 : vector<16x32xf32>
    %31 = arith.mulf %2, %18 : vector<16x32xf32>
    %32 = math.cos %31 : vector<16x32xf32>
    %33 = arith.mulf %30, %32 : vector<16x32xf32>
    %34 = arith.mulf %33, %33 : vector<16x32xf32>
    %cst_16 = arith.constant dense<0.000000e+00> : vector<16xf32>
    %35 = vector.multi_reduction <add>, %34, %cst_16 [1] : vector<16x32xf32> to vector<16xf32>
    %36 = vector.shape_cast %35 : vector<16xf32> to vector<16x1xf32>
    %cst_17 = arith.constant 3.200000e+01 : f32
    %37 = vector.broadcast %cst_17 : f32 to vector<16x1xf32>
    %38 = arith.divf %36, %37 : vector<16x1xf32>
    %cst_18 = arith.constant 1.1920929E-7 : f32
    %39 = vector.broadcast %cst_18 : f32 to vector<16x1xf32>
    %40 = arith.addf %38, %39 : vector<16x1xf32>
    %41 = math.rsqrt %40 : vector<16x1xf32>
    %42 = vector.broadcast %41 : vector<16x1xf32> to vector<16x32xf32>
    %43 = arith.mulf %33, %42 : vector<16x32xf32>
    %c0_19 = arith.constant 0 : index
    %c0_20 = arith.constant 0 : index
    %44 = vector.load %arg5[%c0_19, %c0_20] : memref<1x32xf32, #tpu.memory_space<vmem>>, vector<1x32xf32>
    %45 = vector.broadcast %44 : vector<1x32xf32> to vector<16x32xf32>
    %46 = arith.mulf %43, %45 : vector<16x32xf32>
    %c0_21 = arith.constant 0 : index
    %c0_22 = arith.constant 0 : index
    %47 = vector.load %arg6[%c0_21, %c0_22] : memref<32x16xf32, #tpu.memory_space<vmem>>, vector<32x16xf32>
    %cst_23 = arith.constant dense<0.000000e+00> : vector<16x16xf32>
    %48 = tpu.matmul %46, %47, %cst_23 {dimension_numbers = #tpu.dot_dimension_numbers<[1], [0], [0], [1], [0, 0, 1, 1], [], []>} : vector<16x32xf32>, vector<32x16xf32>, vector<16x16xf32> -> vector<16x16xf32>
    %c0_24 = arith.constant 0 : index
    %c0_25 = arith.constant 0 : index
    %49 = vector.load %arg7[%c0_24, %c0_25] : memref<1x16xf32, #tpu.memory_space<vmem>>, vector<1x16xf32>
    %50 = vector.broadcast %49 : vector<1x16xf32> to vector<16x16xf32>
    %51 = arith.addf %48, %50 : vector<16x16xf32>
    %c0_26 = arith.constant 0 : index
    %c0_27 = arith.constant 0 : index
    %52 = vector.load %arg8[%c0_26, %c0_27] : memref<16x16xf32, #tpu.memory_space<vmem>>, vector<16x16xf32>
    tpu.vector_store %arg8[%c0_26, %c0_27], %51 {strides = array<i32>} : memref<16x16xf32, #tpu.memory_space<vmem>>, vector<16x16xf32>,
    return
  }
  func.func @transform_0(%arg0: i32) -> (i32, i32) {
    %c0_i32 = arith.constant 0 : i32
    %c0_i32_0 = arith.constant 0 : i32
    return %arg0, %c0_i32 : i32, i32
  }
  func.func @transform_1(%arg0: i32) -> (i32, i32) {
    %c0_i32 = arith.constant 0 : i32
    %c0_i32_0 = arith.constant 0 : i32
    return %arg0, %c0_i32 : i32, i32
  }
  func.func @transform_2(%arg0: i32) -> (i32, i32) {
    %c0_i32 = arith.constant 0 : i32
    %c0_i32_0 = arith.constant 0 : i32
    return %arg0, %c0_i32 : i32, i32
  }
  func.func @transform_3(%arg0: i32) -> (i32, i32) {
    %c0_i32 = arith.constant 0 : i32
    %c0_i32_0 = arith.constant 0 : i32
    return %arg0, %c0_i32 : i32, i32
  }
  func.func @transform_4(%arg0: i32) -> (i32, i32) {
    %c0_i32 = arith.constant 0 : i32
    %c0_i32_0 = arith.constant 0 : i32
    %c0_i32_1 = arith.constant 0 : i32
    return %c0_i32, %c0_i32_0 : i32, i32
  }
  func.func @transform_5(%arg0: i32) -> (i32, i32) {
    %c0_i32 = arith.constant 0 : i32
    %c0_i32_0 = arith.constant 0 : i32
    %c0_i32_1 = arith.constant 0 : i32
    return %c0_i32, %c0_i32_0 : i32, i32
  }
  func.func @transform_6(%arg0: i32) -> (i32, i32) {
    %c0_i32 = arith.constant 0 : i32
    %c0_i32_0 = arith.constant 0 : i32
    %c0_i32_1 = arith.constant 0 : i32
    return %c0_i32, %c0_i32_0 : i32, i32
  }
  func.func @transform_7(%arg0: i32) -> (i32, i32) {
    %c0_i32 = arith.constant 0 : i32
    %c0_i32_0 = arith.constant 0 : i32
    return %arg0, %c0_i32 : i32, i32
  }
}

</mosaic_0001>

<llo_original>
// kernel: tpu_custom_call.1
$region0: #{tpu_custom_call.1}
  #allocation0 [shape = 'u32[]', space=smem, size = 0x4, offset = 0x4, fixed_abs, tag = 'smem constant byte address 0x4 - core index']
  #allocation1 [shape = 'u32[144,128]{1,0:T(1,128)}', space=vmem, size = 0x12000, scoped, tag = 'internal scratch']
  %s0 = inlined_call_operand.vmem [shape: f32[32,32], index: 0, kind: input, shape index: {}]
  %s1 = inlined_call_operand.hbm [shape: f32[32,32], index: 1, kind: input, shape index: {}]
  %s2 = inlined_call_operand.hbm [shape: f32[32,32], index: 2, kind: input, shape index: {}]
  %s3 = inlined_call_operand.hbm [shape: f32[32,32], index: 3, kind: input, shape index: {}]
  %s4 = inlined_call_operand.vmem [shape: f32[1,32], index: 4, kind: input, shape index: {}]
  %s5 = inlined_call_operand.vmem [shape: f32[32,16], index: 5, kind: input, shape index: {}]
  %s6 = inlined_call_operand.vmem [shape: f32[1,16], index: 6, kind: input, shape index: {}]
  %s7 = inlined_call_operand.vmem [shape: f32[32,16], index: 7, kind: output, shape index: {}]
  %s8 = sld [smem:[#allocation0]]
  $region73: #{tpu_custom_call.1} parent=0
    _
  %s10 = ssub.s32 1, %s8
  %s11 = scalar_select 0, %s10, %s8
  $region1: #{tpu_custom_call.1} parent=0
    #allocation2 [shape = 'u8[16384]{0}', space=vmem, size = 0x4000, scoped, tag = 'input window, operand 1']
    #allocation3 [shape = 's32[2]{0}', space=sflag, size = 0x8, scoped, tag = 'scoped memory for tpu_custom_call.1']
    #allocation4 [shape = 'u8[16384]{0}', space=vmem, size = 0x4000, scoped, tag = 'input window, operand 2']
    #allocation5 [shape = 's32[2]{0}', space=sflag, size = 0x8, scoped, tag = 'scoped memory for tpu_custom_call.1']
    #allocation6 [shape = 'u8[16384]{0}', space=vmem, size = 0x4000, scoped, tag = 'input window, operand 3']
    %12 = vsyncpa [#allocation3], 0
    %s13 = scalar_lea.sflag [#allocation3], 1
    %14 = vsyncpa %s13, 0
    %15 = vsyncpa [#allocation5], 0
    %s16 = scalar_lea.sflag [#allocation5], 1
    %17 = vsyncpa %s16, 0
    loop: start=0, step=1, limit=4
    $region2: #{tpu_custom_call.1} parent=1 // loop_pre_header
      _
    $region3: #{tpu_custom_call.1} parent=1 // loop_header
      %s19 = sphi 0, %s23
      %p20 = scmp.ge.s32.totalorder %s19, 4
      %s29 = sphi 0, %s31
      %s32 = sphi 0, %s29
      %s33 = sphi 0, %s32
      %s49 = sphi 0, %s33
      %s55 = sphi 0, %s57
      %s58 = sphi 0, %s55
      %s59 = sphi 0, %s58
      %s75 = sphi 0, %s59
      %s81 = sphi 0, %s83
      %s84 = sphi 0, %s81
      %s85 = sphi 0, %s84
      %s101 = sphi 0, %s85
      %s107 = sphi 0, %s109
      %s110 = sphi 0, %s107
      %s111 = sphi 0, %s110
      %s127 = sphi 0, %s111
      %s131 = sphi 0, %s131
      %s133 = sphi 0, %s131
      %s134 = sphi 0, %s133
      %s148 = sphi 0, %s134
      %s152 = sphi 0, %s152
      %s154 = sphi 0, %s152
      %s155 = sphi 0, %s154
      %s169 = sphi 0, %s155
      %s173 = sphi 0, %s173
      %s175 = sphi 0, %s173
      %s176 = sphi 0, %s175
      %s190 = sphi 0, %s176
      %s196 = sphi 0, %s198
      %s199 = sphi 0, %s196
      %s200 = sphi 0, %s199
      %s216 = sphi 0, %s200
    $region4: #{tpu_custom_call.1} parent=1 // loop_header_branch
      %22 = sbr.rel (%p20) target = $region8
    $region5: #{tpu_custom_call.1} parent=1 // loop_body
      %s24 = ssub.s32 %s19, 1
      %s25 = ssub.s32 %s19, 2
      %s26 = sadd.s32 %s19, 1
      %s27 = ssub.s32 %s19, %s26
      %p28 = scmp.eq.s32.totalorder %s27, 0
      %s30 = sadd.s32 %s29, 1
      %s31 = scalar_select %p28, %s29, %s30
      %p34 = pneg %p28
      %p35 = scmp.eq.s32.totalorder %s19, 1
      %p36 = por %p34, %p35
      %p37 = scmp.ne.s32.totalorder %s29, %s32
      %p38 = scmp.eq.s32.totalorder %s19, 0
      %p39 = por %p37, %p38
      %p40 = scmp.ne.s32.totalorder %s29, %s32
      %p41 = scmp.eq.s32.totalorder %s24, 1
      %p42 = por %p40, %p41
      %p43 = scmp.ne.s32.totalorder %s32, %s33
      %p44 = scmp.eq.s32.totalorder %s24, 0
      %p45 = por %p43, %p44
      %p46 = scmp.ne.s32.totalorder %s32, %s33
      %p47 = scmp.eq.s32.totalorder %s25, 1
      %p48 = por %p46, %p47
      %p50 = scmp.ne.s32.totalorder %s33, %s49
      %p51 = scmp.eq.s32.totalorder %s25, 0
      %p52 = por %p50, %p51
      %s53 = ssub.s32 %s19, %s26
      %p54 = scmp.eq.s32.totalorder %s53, 0
      %s56 = sadd.s32 %s55, 1
      %s57 = scalar_select %p54, %s55, %s56
      %p60 = pneg %p54
      %p61 = scmp.eq.s32.totalorder %s19, 1
      %p62 = por %p60, %p61
      %p63 = scmp.ne.s32.totalorder %s55, %s58
      %p64 = scmp.eq.s32.totalorder %s19, 0
      %p65 = por %p63, %p64
      %p66 = scmp.ne.s32.totalorder %s55, %s58
      %p67 = scmp.eq.s32.totalorder %s24, 1
      %p68 = por %p66, %p67
      %p69 = scmp.ne.s32.totalorder %s58, %s59
      %p70 = scmp.eq.s32.totalorder %s24, 0
      %p71 = por %p69, %p70
      %p72 = scmp.ne.s32.totalorder %s58, %s59
      %p73 = scmp.eq.s32.totalorder %s25, 1
      %p74 = por %p72, %p73
      %p76 = scmp.ne.s32.totalorder %s59, %s75
      %p77 = scmp.eq.s32.totalorder %s25, 0
      %p78 = por %p76, %p77
      %s79 = ssub.s32 %s19, %s26
      %p80 = scmp.eq.s32.totalorder %s79, 0
      %s82 = sadd.s32 %s81, 1
      %s83 = scalar_select %p80, %s81, %s82
      %p86 = pneg %p80
      %p87 = scmp.eq.s32.totalorder %s19, 1
      %p88 = por %p86, %p87
      %p89 = scmp.ne.s32.totalorder %s81, %s84
      %p90 = scmp.eq.s32.totalorder %s19, 0
      %p91 = por %p89, %p90
      %p92 = scmp.ne.s32.totalorder %s81, %s84
      %p93 = scmp.eq.s32.totalorder %s24, 1
      %p94 = por %p92, %p93
      %p95 = scmp.ne.s32.totalorder %s84, %s85
      %p96 = scmp.eq.s32.totalorder %s24, 0
      %p97 = por %p95, %p96
      %p98 = scmp.ne.s32.totalorder %s84, %s85
      %p99 = scmp.eq.s32.totalorder %s25, 1
      %p100 = por %p98, %p99
      %p102 = scmp.ne.s32.totalorder %s85, %s101
      %p103 = scmp.eq.s32.totalorder %s25, 0
      %p104 = por %p102, %p103
      %s105 = ssub.s32 %s19, %s26
      %p106 = scmp.eq.s32.totalorder %s105, 0
      %s108 = sadd.s32 %s107, 1
      %s109 = scalar_select %p106, %s107, %s108
      %p112 = pneg %p106
      %p113 = scmp.eq.s32.totalorder %s19, 1
      %p114 = por %p112, %p113
      %p115 = scmp.ne.s32.totalorder %s107, %s110
      %p116 = scmp.eq.s32.totalorder %s19, 0
      %p117 = por %p115, %p116
      %p118 = scmp.ne.s32.totalorder %s107, %s110
      %p119 = scmp.eq.s32.totalorder %s24, 1
      %p120 = por %p118, %p119
      %p121 = scmp.ne.s32.totalorder %s110, %s111
      %p122 = scmp.eq.s32.totalorder %s24, 0
      %p123 = por %p121, %p122
      %p124 = scmp.ne.s32.totalorder %s110, %s111
      %p125 = scmp.eq.s32.totalorder %s25, 1
      %p126 = por %p124, %p125
      %p128 = scmp.ne.s32.totalorder %s111, %s127
      %p129 = scmp.eq.s32.totalorder %s25, 0
      %p130 = por %p128, %p129
      %s132 = sadd.s32 %s131, 1
      %p135 = scmp.eq.s32.totalorder %s19, 1
      %p136 = scmp.ne.s32.totalorder %s131, %s133
      %p137 = scmp.eq.s32.totalorder %s19, 0
      %p138 = por %p136, %p137
      %p139 = scmp.ne.s32.totalorder %s131, %s133
      %p140 = scmp.eq.s32.totalorder %s24, 1
      %p141 = por %p139, %p140
      %p142 = scmp.ne.s32.totalorder %s133, %s134
      %p143 = scmp.eq.s32.totalorder %s24, 0
      %p144 = por %p142, %p143
      %p145 = scmp.ne.s32.totalorder %s133, %s134
      %p146 = scmp.eq.s32.totalorder %s25, 1
      %p147 = por %p145, %p146
      %p149 = scmp.ne.s32.totalorder %s134, %s148
      %p150 = scmp.eq.s32.totalorder %s25, 0
      %p151 = por %p149, %p150
      %s153 = sadd.s32 %s152, 1
      %p156 = scmp.eq.s32.totalorder %s19, 1
      %p157 = scmp.ne.s32.totalorder %s152, %s154
      %p158 = scmp.eq.s32.totalorder %s19, 0
      %p159 = por %p157, %p158
      %p160 = scmp.ne.s32.totalorder %s152, %s154
      %p161 = scmp.eq.s32.totalorder %s24, 1
      %p162 = por %p160, %p161
      %p163 = scmp.ne.s32.totalorder %s154, %s155
      %p164 = scmp.eq.s32.totalorder %s24, 0
      %p165 = por %p163, %p164
      %p166 = scmp.ne.s32.totalorder %s154, %s155
      %p167 = scmp.eq.s32.totalorder %s25, 1
      %p168 = por %p166, %p167
      %p170 = scmp.ne.s32.totalorder %s155, %s169
      %p171 = scmp.eq.s32.totalorder %s25, 0
      %p172 = por %p170, %p171
      %s174 = sadd.s32 %s173, 1
      %p177 = scmp.eq.s32.totalorder %s19, 1
      %p178 = scmp.ne.s32.totalorder %s173, %s175
      %p179 = scmp.eq.s32.totalorder %s19, 0
      %p180 = por %p178, %p179
      %p181 = scmp.ne.s32.totalorder %s173, %s175
      %p182 = scmp.eq.s32.totalorder %s24, 1
      %p183 = por %p181, %p182
      %p184 = scmp.ne.s32.totalorder %s175, %s176
      %p185 = scmp.eq.s32.totalorder %s24, 0
      %p186 = por %p184, %p185
      %p187 = scmp.ne.s32.totalorder %s175, %s176
      %p188 = scmp.eq.s32.totalorder %s25, 1
      %p189 = por %p187, %p188
      %p191 = scmp.ne.s32.totalorder %s176, %s190
      %p192 = scmp.eq.s32.totalorder %s25, 0
      %p193 = por %p191, %p192
      %s194 = ssub.s32 %s19, %s26
      %p195 = scmp.eq.s32.totalorder %s194, 0
      %s197 = sadd.s32 %s196, 1
      %s198 = scalar_select %p195, %s196, %s197
      %p201 = pneg %p195
      %p202 = scmp.eq.s32.totalorder %s19, 1
      %p203 = por %p201, %p202
      %p204 = scmp.ne.s32.totalorder %s196, %s199
      %p205 = scmp.eq.s32.totalorder %s19, 0
      %p206 = por %p204, %p205
      %p207 = scmp.ne.s32.totalorder %s196, %s199
      %p208 = scmp.eq.s32.totalorder %s24, 1
      %p209 = por %p207, %p208
      %p210 = scmp.ne.s32.totalorder %s199, %s200
      %p211 = scmp.eq.s32.totalorder %s24, 0
      %p212 = por %p210, %p211
      %p213 = scmp.ne.s32.totalorder %s199, %s200
      %p214 = scmp.eq.s32.totalorder %s25, 1
      %p215 = por %p213, %p214
      %p217 = scmp.ne.s32.totalorder %s200, %s216
      %p218 = scmp.eq.s32.totalorder %s25, 0
      %p219 = por %p217, %p218
      %p220 = scmp.le.s32.totalorder 1, %s19
      %p221 = scmp.lt.s32.totalorder %s19, 3
      %p222 = pnand %p220, %p221
      %p223 = pneg %p222
      // Predicated region
      $region9: #{tpu_custom_call.1} parent=5 // pred_check
        _
      $region10: #{tpu_custom_call.1} parent=5 // pred_check_branch
        %225 = sbr.rel (%p222) target = $region12
      $region11: #{tpu_custom_call.1} parent=5 // pred_region
        %s226 = ssub.s32 %s19, 1
        // Predicated region
        $region13: #{tpu_custom_call.1} parent=11 // pred_check
          %p227 = pneg %p144
        $region14: #{tpu_custom_call.1} parent=11 // pred_check_branch
          %229 = sbr.rel (%p227) target = $region16
        $region15: #{tpu_custom_call.1} parent=11 // pred_region
          _
        $region16: #{tpu_custom_call.1} parent=11 // pred_fallthru
          _
        // Predicated region
        $region17: #{tpu_custom_call.1} parent=11 // pred_check
          %p230 = pneg %p165
        $region18: #{tpu_custom_call.1} parent=11 // pred_check_branch
          %232 = sbr.rel (%p230) target = $region20
        $region19: #{tpu_custom_call.1} parent=11 // pred_region
          _
        $region20: #{tpu_custom_call.1} parent=11 // pred_fallthru
          _
        // Predicated region
        $region21: #{tpu_custom_call.1} parent=11 // pred_check
          %p233 = pneg %p186
        $region22: #{tpu_custom_call.1} parent=11 // pred_check_branch
          %235 = sbr.rel (%p233) target = $region24
        $region23: #{tpu_custom_call.1} parent=11 // pred_region
          _
        $region24: #{tpu_custom_call.1} parent=11 // pred_fallthru
          _
      $region12: #{tpu_custom_call.1} parent=5 // pred_fallthru
        _
      %p236 = scmp.lt.s32.totalorder %s19, 2
      // Predicated region
      $region25: #{tpu_custom_call.1} parent=5 // pred_check
        %p237 = pneg %p236
      $region26: #{tpu_custom_call.1} parent=5 // pred_check_branch
        %239 = sbr.rel (%p237) target = $region28
      $region27: #{tpu_custom_call.1} parent=5 // pred_region
        // Predicated region
        $region29: #{tpu_custom_call.1} parent=27 // pred_check
          %p240 = pneg %p39
        $region30: #{tpu_custom_call.1} parent=27 // pred_check_branch
          %242 = sbr.rel (%p240) target = $region32
        $region31: #{tpu_custom_call.1} parent=27 // pred_region
          %s243 = smul.u32 2, %s19
          %p244 = scmp.lt.s32.totalorder %s243, 3
          %s245 = scalar_select %p244, %s243, 3
          %s246 = smul.addr %s245, 8
          %s247 = scalar_lea.vmem %s0, %s246
          %s248 = smul.u32 2, %s19
        $region32: #{tpu_custom_call.1} parent=27 // pred_fallthru
          _
        // Predicated region
        $region33: #{tpu_custom_call.1} parent=27 // pred_check
          %p249 = pneg %p65
        $region34: #{tpu_custom_call.1} parent=27 // pred_check_branch
          %251 = sbr.rel (%p249) target = $region36
        $region35: #{tpu_custom_call.1} parent=27 // pred_region
          %s252 = sand.u32 %s55, 1
          %s253 = scalar_lea.sflag [#allocation3], %s252
          %s254 = sand.u32 %s55, 1
          %s255 = smul.addr %s254, 16
          %s256 = scalar_lea.vmem [#allocation2], %s255
          %s257 = smul.u32 2, %s19
          %s259 = ssub.s32 256, 256
          %260 = vsyncadd %s253, %s259
          %s261 = smul.addr %s257, 128
          %s262 = scalar_lea.hbm %s1, %s261
          %s263 = sshll.u32 %s256, 4
          %s264 = int_to_ptr.vmem [resolvable:$true] %s263
          %269 = dma.hbm_to_vmem [thread:$0]  %s262, 256, %s264, %s253, 128, 128, 8
        $region36: #{tpu_custom_call.1} parent=27 // pred_fallthru
          _
        // Predicated region
        $region37: #{tpu_custom_call.1} parent=27 // pred_check
          %p270 = pneg %p91
        $region38: #{tpu_custom_call.1} parent=27 // pred_check_branch
          %272 = sbr.rel (%p270) target = $region40
        $region39: #{tpu_custom_call.1} parent=27 // pred_region
          %s273 = sand.u32 %s19, 1
          %s274 = scalar_lea.sflag [#allocation5], %s273
          %s275 = sand.u32 %s81, 1
          %s276 = smul.addr %s275, 16
          %s277 = scalar_lea.vmem [#allocation4], %s276
          %s278 = smul.u32 2, %s19
          %s280 = ssub.s32 256, 256
          %281 = vsyncadd %s274, %s280
          %s282 = smul.addr %s278, 128
          %s283 = scalar_lea.hbm %s2, %s282
          %s284 = sshll.u32 %s277, 4
          %s285 = int_to_ptr.vmem [resolvable:$true] %s284
          %290 = dma.hbm_to_vmem [thread:$0]  %s283, 256, %s285, %s274, 128, 128, 8
        $region40: #{tpu_custom_call.1} parent=27 // pred_fallthru
          _
        // Predicated region
        $region41: #{tpu_custom_call.1} parent=27 // pred_check
          %p291 = pneg %p117
        $region42: #{tpu_custom_call.1} parent=27 // pred_check_branch
          %293 = sbr.rel (%p291) target = $region44
        $region43: #{tpu_custom_call.1} parent=27 // pred_region
          %s294 = sand.u32 %s19, 1
          %s295 = scalar_lea.sflag [#allocation5], %s294
          %s296 = sand.u32 %s107, 1
          %s297 = smul.addr %s296, 16
          %s298 = scalar_lea.vmem [#allocation6], %s297
          %s299 = smul.u32 2, %s19
          %s301 = ssub.s32 256, 256
          %302 = vsyncadd %s295, %s301
          %s303 = smul.addr %s299, 128
          %s304 = scalar_lea.hbm %s3, %s303
          %s305 = sshll.u32 %s298, 4
          %s306 = int_to_ptr.vmem [resolvable:$true] %s305
          %311 = dma.hbm_to_vmem [thread:$0]  %s304, 256, %s306, %s295, 128, 128, 8
        $region44: #{tpu_custom_call.1} parent=27 // pred_fallthru
          _
      $region28: #{tpu_custom_call.1} parent=5 // pred_fallthru
        _
      %p312 = scmp.le.s32.totalorder 1, %s19
      %p313 = scmp.lt.s32.totalorder %s19, 3
      %p314 = pnand %p312, %p313
      %p315 = pneg %p314
      // Predicated region
      $region45: #{tpu_custom_call.1} parent=5 // pred_check
        _
      $region46: #{tpu_custom_call.1} parent=5 // pred_check_branch
        %317 = sbr.rel (%p314) target = $region48
      $region47: #{tpu_custom_call.1} parent=5 // pred_region
        %s318 = ssub.s32 %s19, 1
        %s319 = sand.u32 %s58, 1
        %s320 = scalar_lea.sflag [#allocation3], %s319
        %s321 = sand.u32 %s58, 1
        %s322 = smul.addr %s321, 16
        %s323 = scalar_lea.vmem [#allocation2], %s322
        // Predicated region
        $region49: #{tpu_custom_call.1} parent=47 // pred_check
          %p324 = pneg %p71
        $region50: #{tpu_custom_call.1} parent=47 // pred_check_branch
          %326 = sbr.rel (%p324) target = $region52
        $region51: #{tpu_custom_call.1} parent=47 // pred_region
          %327 = dma.done %s320, 256
        $region52: #{tpu_custom_call.1} parent=47 // pred_fallthru
          _
        %s328 = sand.u32 %s24, 1
        %s329 = scalar_lea.sflag [#allocation5], %s328
        %s330 = sand.u32 %s84, 1
        %s331 = smul.addr %s330, 16
        %s332 = scalar_lea.vmem [#allocation4], %s331
        // Predicated region
        $region53: #{tpu_custom_call.1} parent=47 // pred_check
          %p333 = pneg %p97
        $region54: #{tpu_custom_call.1} parent=47 // pred_check_branch
          %335 = sbr.rel (%p333) target = $region56
        $region55: #{tpu_custom_call.1} parent=47 // pred_region
          %336 = dma.done %s329, 256
        $region56: #{tpu_custom_call.1} parent=47 // pred_fallthru
          _
        %s337 = sand.u32 %s24, 1
        %s338 = scalar_lea.sflag [#allocation5], %s337
        %s339 = sand.u32 %s110, 1
        %s340 = smul.addr %s339, 16
        %s341 = scalar_lea.vmem [#allocation6], %s340
        // Predicated region
        $region57: #{tpu_custom_call.1} parent=47 // pred_check
          %p342 = pneg %p123
        $region58: #{tpu_custom_call.1} parent=47 // pred_check_branch
          %344 = sbr.rel (%p342) target = $region60
        $region59: #{tpu_custom_call.1} parent=47 // pred_region
          %345 = dma.done %s338, 256
        $region60: #{tpu_custom_call.1} parent=47 // pred_fallthru
          _
        %s346 = smul.u32 2, %s24
        %p347 = scmp.lt.s32.totalorder %s346, 3
        %s348 = scalar_select %p347, %s346, 3
        %s349 = smul.addr %s348, 8
        %s350 = scalar_lea.vmem %s0, %s349
        %p351 = pneg %p45
        %p352 = pneg %p42
        %s353 = sand.u32 %s58, 1
        %s354 = scalar_lea.sflag [#allocation3], %s353
        %s355 = sand.u32 %s58, 1
        %s356 = smul.addr %s355, 16
        %s357 = scalar_lea.vmem [#allocation2], %s356
        %p358 = pneg %p71
        %p359 = pneg %p68
        %s360 = sand.u32 %s24, 1
        %s361 = scalar_lea.sflag [#allocation5], %s360
        %s362 = sand.u32 %s84, 1
        %s363 = smul.addr %s362, 16
        %s364 = scalar_lea.vmem [#allocation4], %s363
        %p365 = pneg %p97
        %p366 = pneg %p94
        %s367 = sand.u32 %s24, 1
        %s368 = scalar_lea.sflag [#allocation5], %s367
        %s369 = sand.u32 %s110, 1
        %s370 = smul.addr %s369, 16
        %s371 = scalar_lea.vmem [#allocation6], %s370
        %p372 = pneg %p123
        %p373 = pneg %p120
        %p374 = pneg %p144
        %p375 = pneg %p141
        %p376 = pneg %p165
        %p377 = pneg %p162
        %p378 = pneg %p186
        %p379 = pneg %p183
        %p380 = pneg %p212
        %p381 = pneg %p209
        %s382 = smul.u32 2, %s24
        %p383 = scmp.lt.s32.totalorder %s382, 3
        %s384 = scalar_select %p383, %s382, 3
        %s385 = smul.addr %s384, 8
        %s386 = scalar_lea.vmem %s7, %s385
        %s387 = smul.u32 2, %s24
        %p388 = scmp.lt.s32.totalorder %s387, 3
        %s389 = scalar_select %p388, %s387, 3
        %s390 = smul.addr %s389, 8
        %s391 = scalar_lea.vmem %s0, %s390
        %s392 = smul.u32 2, %s24
        %s393 = smul.u32 2, %s24
        %s394 = smul.u32 2, %s24
        %s395 = smul.u32 2, %s24
        %s396 = smul.u32 2, %s24
        %p397 = scmp.lt.s32.totalorder %s396, 3
        %s398 = scalar_select %p397, %s396, 3
        %s399 = smul.addr %s398, 8
        %s400 = scalar_lea.vmem %s7, %s399
        %s401 = smul.u32 2, %s24
        %v402 = vld [vmem:[%s391] sm:$0xff]
        %v403 = vld [vmem:[%s391 + $0x8] sm:$0xff]
        %v404 = vld [vmem:[%s323] sm:$0xff]
        %v405 = vld [vmem:[%s323 + $0x8] sm:$0xff]
        %v406 = vld [vmem:[%s332] sm:$0xff]
        %v407 = vld [vmem:[%s332 + $0x8] sm:$0xff]
        %v408 = vld [vmem:[%s341] sm:$0xff]
        %v409 = vld [vmem:[%s341 + $0x8] sm:$0xff]
        %v410 = vand.u32 2147483647, %v408
        %v411 = vand.u32 2147483647, %v409
        %vm412 = vcmp.lt.f32.partialorder %v408, 0.0
        %vm413 = vcmp.lt.f32.partialorder %v409, 0.0
        %v414 = vsel %vm412, 3.1415927, 0.0
        %v415 = vsel %vm413, 3.1415927, 0.0
        %v416 = vadd.f32 %v404, %v414
        %v417 = vadd.f32 %v405, %v415
        %v418 = vadd.f32 %v416, 3.1415927
        %v419 = vadd.f32 %v417, 3.1415927
        %v420 = vmul.f32 %v418, 0.15915494
        %v421 = vmul.f32 %v419, 0.15915494
        %v422 = vfloor.f32 %v420
        %v423 = vfloor.f32 %v421
        %v424 = vmul.f32 %v422, 6.2831855
        %v425 = vmul.f32 %v423, 6.2831855
        %v426 = vsub.f32 %v416, %v424
        %v427 = vsub.f32 %v417, %v425
        %vm428 = vcmp.gt.f32.partialorder %v410, 0.0
        %vm429 = vcmp.gt.f32.partialorder %v411, 0.0
        %v430 = vsel %vm428, %v410, 1.0
        %v431 = vsel %vm429, %v411, 1.0
        %v432 = vlog2.pop %v430
        %v433 = vmul.f32 %v432, 0.6931472
        %v434 = vlog2.pop %v431
        %v435 = vmul.f32 %v434, 0.6931472
        %v436 = vmul.f32 %v406, %v433
        %v437 = vmul.f32 %v407, %v435
        %v438 = vmul.f32 %v436, 1.442695
        %v439 = vpow.pop %v438
        %v440 = vmul.f32 %v437, 1.442695
        %v441 = vpow.pop %v440
        %v442 = vsel %vm428, %v439, 0.0
        %v443 = vsel %vm429, %v441, 0.0
        %v444 = vmul.f32 %v402, %v442
        %v445 = vmul.f32 %v403, %v443
        %v446 = vmul.f32 %v406, %v426
        %v447 = vmul.f32 %v407, %v427
        %v448 = vand.u32 2147483647, %v446
        %vm449 = vcmp.le.f32.partialorder %v448, 0.7853982
        %vm450 = vcmp.lt.s32.totalorder %v446, 0
        %v451 = vand.u32 %v446, 2139095040
        %v452 = vshrl.u32 %v451, 23
        %v453 = vsub.s32 %v452, 127
        %v454 = vand.u32 2147483647, %v446
        %v455 = vand.u32 %v454, 8388607
        %v456 = vor.u32 %v455, 8388608
        %v457 = vsub.s32 0, %v456
        %v458 = vadd.s32 %v453, 1
        %vm459 = vcmp.gt.s32.totalorder %v458, 0
        %v460 = vsel %vm459, %v458, 0
        %v461 = vshrl.u32 %v460, 5
        %v462 = vand.u32 %v460, 31
        %v463 = vsub.s32 32, %v462
        %v464 = vshrl.u32 683565275, %v463
        %v465 = vshll.u32 683565275, %v462
        %v466 = vshrl.u32 2475754826, %v463
        %v467 = vor.u32 %v465, %v466
        %v468 = vshll.u32 2475754826, %v462
        %v469 = vshrl.u32 2131351028, %v463
        %v470 = vor.u32 %v468, %v469
        %v471 = vshll.u32 2131351028, %v462
        %v472 = vshrl.u32 2102212464, %v463
        %v473 = vor.u32 %v471, %v472
        %v474 = vshll.u32 2102212464, %v462
        %v475 = vshrl.u32 920167782, %v463
        %v476 = vor.u32 %v474, %v475
        %v477 = vshll.u32 920167782, %v462
        %v478 = vshrl.u32 1326507024, %v463
        %v479 = vor.u32 %v477, %v478
        %vm480 = vcmp.lt.s32.totalorder %v461, 1
        %vm481 = vcmp.lt.s32.totalorder %v461, 2
        %vm482 = vcmp.lt.s32.totalorder %v461, 3
        %vm483 = vcmp.lt.s32.totalorder %v461, 4
        %v484 = vsel %vm480, %v464, %v467
        %v485 = vsel %vm483, %v473, 2102212464
        %v486 = vsel %vm482, %v470, %v485
        %v487 = vsel %vm481, %v484, %v486
        %v488 = vsel %vm480, %v467, %v470
        %v489 = vsel %vm483, %v476, 920167782
        %v490 = vsel %vm482, %v473, %v489
        %v491 = vsel %vm481, %v488, %v490
        %v492 = vsel %vm480, %v470, %v473
        %v493 = vsel %vm483, %v479, 1326507024
        %v494 = vsel %vm482, %v476, %v493
        %v495 = vsel %vm481, %v492, %v494
        %v496 = vshll.u32 %v456, 8
        %v497 = vmul.u32.u64.compose %v496, %v495
        %v498 = vextract.low.u32 %v497
        %v499 = vextract.high.u32 %v497
        %v500 = vmul.u32.u64.compose %v496, %v491
        %v501 = vextract.low.u32 %v500
        %v502 = vextract.high.u32 %v500
        %v503 = vmul.u32 %v496, %v487
        %v504 = vadd.s32 %v499, %v501
        %vm505 = vc.u32 %v499, %v501
        %v506 = vadd.s32 %v502, 1
        %v507 = vsel %vm505, %v506, %v502
        %v508 = vadd.s32 %v503, %v507
        %v509 = vadd.s32 %v508, 536870912
        %v510 = vshrl.u32 %v509, 30
        %v511 = vshll.u32 %v510, 30
        %v512 = vsub.s32 %v508, %v511
        %vm513 = vcmp.lt.s32.totalorder %v512, 0
        %v514 = vsub.s32 0, %v512
        %v515 = vsel %vm513, %v514, %v512
        %v516 = vclz %v515
        %v517 = vsub.s32 %v516, 2
        %vm518 = vcmp.gt.s32.totalorder 0, %v517
        %v519 = vsel %vm518, 0, %v517
        %v520 = vsub.s32 32, %v519
        %v521 = vshll.u32 %v512, %v519
        %v522 = vshrl.u32 %v504, %v520
        %v523 = vor.u32 %v521, %v522
        %v524 = vsub.s32 4294967266, %v519
        %v525 = vadd.s32 %v524, 127
        %v526 = vshll.u32 %v525, 23
        %v527 = vor.u32 4788187, %v526
        %v528 = vand.u32 2147483647, %v527
        %v530 = vcvt.s32.f32 %v523
        %v531 = vmul.f32 %v530, %v528
        %v532 = vxor.u32 %v531, 2147483648
        %v533 = vsel %vm450, %v532, %v531
        %v534 = vsub.s32 4, %v510
        %v535 = vsel %vm450, %v534, %v510
        %v536 = vsel %vm449, %v446, %v533
        %v537 = vsel %vm449, 0, %v535
        %v538 = vcosq.f32.pop %v536
        %v539 = vsinq.f32.pop %v536
        %vm540 = vweird.f32 %v446
        %v541 = vand.u32 %v537, 3
        %vm542 = vcmp.lt.s32.totalorder %v541, 2
        %vm543 = vcmp.eq.s32.totalorder %v541, 0
        %v544 = vxor.u32 %v539, 2147483648
        %v545 = vsel %vm543, %v538, %v544
        %vm546 = vcmp.eq.s32.totalorder %v541, 2
        %v547 = vxor.u32 %v538, 2147483648
        %v548 = vsel %vm546, %v547, %v539
        %v549 = vsel %vm542, %v545, %v548
        %v550 = vsel %vm540, nan, %v549
        %v551 = vand.u32 2147483647, %v447
        %vm552 = vcmp.le.f32.partialorder %v551, 0.7853982
        %vm553 = vcmp.lt.s32.totalorder %v447, 0
        %v554 = vand.u32 %v447, 2139095040
        %v555 = vshrl.u32 %v554, 23
        %v556 = vsub.s32 %v555, 127
        %v557 = vand.u32 2147483647, %v447
        %v558 = vand.u32 %v557, 8388607
        %v559 = vor.u32 %v558, 8388608
        %v560 = vsub.s32 0, %v559
        %v561 = vadd.s32 %v556, 1
        %vm562 = vcmp.gt.s32.totalorder %v561, 0
        %v563 = vsel %vm562, %v561, 0
        %v564 = vshrl.u32 %v563, 5
        %v565 = vand.u32 %v563, 31
        %v566 = vsub.s32 32, %v565
        %v567 = vshrl.u32 683565275, %v566
        %v568 = vshll.u32 683565275, %v565
        %v569 = vshrl.u32 2475754826, %v566
        %v570 = vor.u32 %v568, %v569
        %v571 = vshll.u32 2475754826, %v565
        %v572 = vshrl.u32 2131351028, %v566
        %v573 = vor.u32 %v571, %v572
        %v574 = vshll.u32 2131351028, %v565
        %v575 = vshrl.u32 2102212464, %v566
        %v576 = vor.u32 %v574, %v575
        %v577 = vshll.u32 2102212464, %v565
        %v578 = vshrl.u32 920167782, %v566
        %v579 = vor.u32 %v577, %v578
        %v580 = vshll.u32 920167782, %v565
        %v581 = vshrl.u32 1326507024, %v566
        %v582 = vor.u32 %v580, %v581
        %vm583 = vcmp.lt.s32.totalorder %v564, 1
        %vm584 = vcmp.lt.s32.totalorder %v564, 2
        %vm585 = vcmp.lt.s32.totalorder %v564, 3
        %vm586 = vcmp.lt.s32.totalorder %v564, 4
        %v587 = vsel %vm583, %v567, %v570
        %v588 = vsel %vm586, %v576, 2102212464
        %v589 = vsel %vm585, %v573, %v588
        %v590 = vsel %vm584, %v587, %v589
        %v591 = vsel %vm583, %v570, %v573
        %v592 = vsel %vm586, %v579, 920167782
        %v593 = vsel %vm585, %v576, %v592
        %v594 = vsel %vm584, %v591, %v593
        %v595 = vsel %vm583, %v573, %v576
        %v596 = vsel %vm586, %v582, 1326507024
        %v597 = vsel %vm585, %v579, %v596
        %v598 = vsel %vm584, %v595, %v597
        %v599 = vshll.u32 %v559, 8
        %v600 = vmul.u32.u64.compose %v599, %v598
        %v601 = vextract.low.u32 %v600
        %v602 = vextract.high.u32 %v600
        %v603 = vmul.u32.u64.compose %v599, %v594
        %v604 = vextract.low.u32 %v603
        %v605 = vextract.high.u32 %v603
        %v606 = vmul.u32 %v599, %v590
        %v607 = vadd.s32 %v602, %v604
        %vm608 = vc.u32 %v602, %v604
        %v609 = vadd.s32 %v605, 1
        %v610 = vsel %vm608, %v609, %v605
        %v611 = vadd.s32 %v606, %v610
        %v612 = vadd.s32 %v611, 536870912
        %v613 = vshrl.u32 %v612, 30
        %v614 = vshll.u32 %v613, 30
        %v615 = vsub.s32 %v611, %v614
        %vm616 = vcmp.lt.s32.totalorder %v615, 0
        %v617 = vsub.s32 0, %v615
        %v618 = vsel %vm616, %v617, %v615
        %v619 = vclz %v618
        %v620 = vsub.s32 %v619, 2
        %vm621 = vcmp.gt.s32.totalorder 0, %v620
        %v622 = vsel %vm621, 0, %v620
        %v623 = vsub.s32 32, %v622
        %v624 = vshll.u32 %v615, %v622
        %v625 = vshrl.u32 %v607, %v623
        %v626 = vor.u32 %v624, %v625
        %v627 = vsub.s32 4294967266, %v622
        %v628 = vadd.s32 %v627, 127
        %v629 = vshll.u32 %v628, 23
        %v630 = vor.u32 4788187, %v629
        %v631 = vand.u32 2147483647, %v630
        %v633 = vcvt.s32.f32 %v626
        %v634 = vmul.f32 %v633, %v631
        %v635 = vxor.u32 %v634, 2147483648
        %v636 = vsel %vm553, %v635, %v634
        %v637 = vsub.s32 4, %v613
        %v638 = vsel %vm553, %v637, %v613
        %v639 = vsel %vm552, %v447, %v636
        %v640 = vsel %vm552, 0, %v638
        %v641 = vcosq.f32.pop %v639
        %v642 = vsinq.f32.pop %v639
        %vm643 = vweird.f32 %v447
        %v644 = vand.u32 %v640, 3
        %vm645 = vcmp.lt.s32.totalorder %v644, 2
        %vm646 = vcmp.eq.s32.totalorder %v644, 0
        %v647 = vxor.u32 %v642, 2147483648
        %v648 = vsel %vm646, %v641, %v647
        %vm649 = vcmp.eq.s32.totalorder %v644, 2
        %v650 = vxor.u32 %v641, 2147483648
        %v651 = vsel %vm649, %v650, %v642
        %v652 = vsel %vm645, %v648, %v651
        %v653 = vsel %vm643, nan, %v652
        %v654 = vmul.f32 %v444, %v550
        %v655 = vmul.f32 %v445, %v653
        %v656 = vmul.f32 %v654, %v654
        %v657 = vmul.f32 %v655, %v655
        %vm658 = vcmask 261120
        %v659 = vsel %vm658, %v656, 0.0
        %660 = vadd.xlane.f32.xlu0 %v659
        %v661 = vpop.xlane.xlu0 %660
        %v662 = vsel %vm658, %v657, 0.0
        %663 = vadd.xlane.f32.xlu0 %v662
        %v664 = vpop.xlane.xlu0 %663
        %v665 = vrcp.pop 32.0
        %v666 = vmul.f32 %v661, %v665
        %v667 = vmul.f32 %v664, %v665
        %v668 = vadd.f32 %v666, 1.1920929e-07
        %v669 = vadd.f32 %v667, 1.1920929e-07
        %v670 = vrsqrt.pop %v668
        %v671 = vrsqrt.pop %v669
        %v672 = vmul.f32 %v654, %v670
        %v673 = vmul.f32 %v655, %v671
        %v674 = vld [vmem:[%s4] sm:$0x1]
        %v676 = vlaneseq
        %v677 = vshrl.u32 %v676, 7
        %v678 = vsub.s32 0, %v677
        %v679 = vrot.slane %v674, %v678
        %v681 = vmul.f32 %v672, %v679
        %v682 = vmul.f32 %v673, %v679
        %v683 = vld [vmem:[%s5] sm:$0xff]
        %v684 = vld [vmem:[%s5 + $0x8] sm:$0xff]
        %v685 = vld [vmem:[%s5 + $0x10] sm:$0xff]
        %v686 = vld [vmem:[%s5 + $0x18] sm:$0xff]
        %v687 = vld [vmem:[%s6] sm:$0x1]
        %v689 = vlaneseq
        %v690 = vshrl.u32 %v689, 7
        %v691 = vsub.s32 0, %v690
        %v692 = vrot.slane %v687, %v691
        %v695 = vsel %vm658, %v681, 0
        %v698 = vsel %vm658, %v682, 0
        %700 = vmatprep.subr.mxu0 0.0
        %701 = vmatpush1.msra.mxu0 %v683
        %702 = vmatprep.subr.mxu0 0.0
        %703 = vmatpush1.msra.mxu0 %v684
        %704 = vmatprep.subr.mxu0 0.0
        %705 = vmatpush1.msra.mxu0 %v685
        %706 = vmatprep.subr.mxu0 0.0
        %707 = vmatpush1.msra.mxu0 %v686
        %708 = vmatprep.subr.mxu0 0.0
        %709 = vmatpush1.msra.mxu0 0.0
        %710 = vmatprep.subr.mxu0 0.0
        %711 = vmatpush1.msra.mxu0 0.0
        %712 = vmatprep.subr.mxu0 0.0
        %713 = vmatpush1.msra.mxu0 0.0
        %714 = vmatprep.subr.mxu0 0.0
        %715 = vmatpush1.msra.mxu0 0.0
        %716 = vmatprep.subr.mxu0 0.0
        %717 = vmatpush1.msra.mxu0 0.0
        %718 = vmatprep.subr.mxu0 0.0
        %719 = vmatpush1.msra.mxu0 0.0
        %720 = vmatprep.subr.mxu0 0.0
        %721 = vmatpush1.msra.mxu0 0.0
        %722 = vmatprep.subr.mxu0 0.0
        %723 = vmatpush1.msra.mxu0 0.0
        %724 = vmatprep.subr.mxu0 0.0
        %725 = vmatpush1.msra.mxu0 0.0
        %726 = vmatprep.subr.mxu0 0.0
        %727 = vmatpush1.msra.mxu0 0.0
        %728 = vmatprep.subr.mxu0 0.0
        %729 = vmatpush1.msra.mxu0 0.0
        %730 = vmatprep.subr.mxu0 0.0
        %731 = vmatpush1.msra.mxu0 0.0
        %732 = vmatprep.subr.mxu0 0.0
        %733 = vmatpush1.msra.mxu0 0.0
        %734 = vmatprep.subr.mxu0 0.0
        %735 = vmatpush1.msra.mxu0 0.0
        %736 = vmatprep.subr.mxu0 0.0
        %737 = vmatpush1.msra.mxu0 0.0
        %738 = vmatprep.subr.mxu0 0.0
        %739 = vmatpush1.msra.mxu0 0.0
        %740 = vmatprep.subr.mxu0 0.0
        %741 = vmatpush1.msra.mxu0 0.0
        %742 = vmatprep.subr.mxu0 0.0
        %743 = vmatpush1.msra.mxu0 0.0
        %744 = vmatprep.subr.mxu0 0.0
        %745 = vmatpush1.msra.mxu0 0.0
        %746 = vmatprep.subr.mxu0 0.0
        %747 = vmatpush1.msra.mxu0 0.0
        %748 = vmatprep.subr.mxu0 0.0
        %749 = vmatpush1.msra.mxu0 0.0
        %750 = vmatprep.subr.mxu0 0.0
        %751 = vmatpush1.msra.mxu0 0.0
        %752 = vmatprep.subr.mxu0 0.0
        %753 = vmatpush1.msra.mxu0 0.0
        %754 = vmatprep.subr.mxu0 0.0
        %755 = vmatpush1.msra.mxu0 0.0
        %756 = vmatprep.subr.mxu0 0.0
        %757 = vmatpush1.msra.mxu0 0.0
        %758 = vmatprep.subr.mxu0 0.0
        %759 = vmatpush1.msra.mxu0 0.0
        %760 = vmatprep.subr.mxu0 0.0
        %761 = vmatpush1.msra.mxu0 0.0
        %762 = vmatprep.subr.mxu0 0.0
        %763 = vmatpush1.msra.mxu0 0.0
        %764 = vmatprep.mubr.f32.mxu0 0.0
        %765 = vmatmul.mubr.f32.gmra.mrb[0].mxu0 %v695
        %v766 = vpop.f32.mrb[0].mxu0
        %v767 = vadd.f32 %v692, %v766
        %v768 = vpop.f32.mrb[0].mxu0
        %769 = vmatprep.mubr.f32.mxu0 0.0
        %770 = vmatmul.mubr.f32.gmra.mrb[0].mxu0 %v698
        %v771 = vpop.f32.mrb[0].mxu0
        %v772 = vadd.f32 %v692, %v771
        %v773 = vpop.f32.mrb[0].mxu0
        %774 = vdwg.mxu0
        %vm775 = vcmask 130048
        %776 = vst.msk [vmem:[%s400] sm:$0xff] %vm775, %v767
        %777 = vst.msk [vmem:[%s400 + $0x8] sm:$0xff] %vm775, %v772
        %s778 = smul.u32 2, %s24
        %p779 = scmp.lt.s32.totalorder %s778, 3
        %s780 = scalar_select %p779, %s778, 3
        %s781 = smul.addr %s780, 8
        %s782 = scalar_lea.vmem %s7, %s781
        // Predicated region
        $region61: #{tpu_custom_call.1} parent=47 // pred_check
          %p783 = pneg %p209
        $region62: #{tpu_custom_call.1} parent=47 // pred_check_branch
          %785 = sbr.rel (%p783) target = $region64
        $region63: #{tpu_custom_call.1} parent=47 // pred_region
          %s786 = smul.u32 2, %s24
        $region64: #{tpu_custom_call.1} parent=47 // pred_fallthru
          _
      $region48: #{tpu_custom_call.1} parent=5 // pred_fallthru
        _
      %p787 = scmp.le.s32.totalorder 2, %s19
      // Predicated region
      $region65: #{tpu_custom_call.1} parent=5 // pred_check
        %p788 = pneg %p787
      $region66: #{tpu_custom_call.1} parent=5 // pred_check_branch
        %790 = sbr.rel (%p788) target = $region68
      $region67: #{tpu_custom_call.1} parent=5 // pred_region
        %s791 = ssub.s32 %s19, 2
        // Predicated region
        $region69: #{tpu_custom_call.1} parent=67 // pred_check
          %p792 = pneg %p215
        $region70: #{tpu_custom_call.1} parent=67 // pred_check_branch
          %794 = sbr.rel (%p792) target = $region72
        $region71: #{tpu_custom_call.1} parent=67 // pred_region
          %s795 = smul.u32 2, %s25
          %p796 = scmp.lt.s32.totalorder %s795, 3
          %s797 = scalar_select %p796, %s795, 3
          %s798 = smul.addr %s797, 8
          %s799 = scalar_lea.vmem %s7, %s798
        $region72: #{tpu_custom_call.1} parent=67 // pred_fallthru
          _
      $region68: #{tpu_custom_call.1} parent=5 // pred_fallthru
        _
    $region6: #{tpu_custom_call.1} parent=1 // loop_footer
      %s23 = sadd.s32 1, %s19
    $region7: #{tpu_custom_call.1} parent=1 // loop_footer_branch
      %18 = sbr.rel target = $region3
    $region8: #{tpu_custom_call.1} parent=1 // loop_exit
      _
    %800 = vsyncpa [#allocation3], 1
    %s801 = scalar_lea.sflag [#allocation3], 1
    %802 = vsyncpa %s801, 1
    %803 = vsyncpa [#allocation5], 1
    %s804 = scalar_lea.sflag [#allocation5], 1
    %805 = vsyncpa %s804, 1

</llo_original>
